<compile_context>
chip_gen: v5e
topology: v5e:2x2
jax: 0.10.0
libtpu: 0.0.40
codegen_flags: <defaults>
</compile_context>

<pallas_src>
import jax
import jax.numpy as jnp
from jax.experimental import pallas as pl
from jax.experimental.pallas import tpu as pltpu

TILE_B_MAX = 1024   # batch tile cap (sweepable 512-2048); working set stays far below VMEM


def _round_up(x, m):
    return (x + m - 1) // m * m


def _batch_tiling(batch):
    """Batch tile: as large as possible (amortize per-step overhead), multiple of 16
    (bf16 sublane packing), and >= 2 grid steps once the batch is big enough to split
    across v7x's two TensorCores."""
    b16 = _round_up(max(batch, 16), 16)
    n_steps = max(2, pl.cdiv(b16, TILE_B_MAX)) if b16 >= 64 else 1
    tile_b = _round_up(pl.cdiv(b16, n_steps), 16)
    return tile_b, tile_b * n_steps


def mlp_kernel(x_ref, w1_ref, b1_ref, w2_ref, b2_ref, w3_ref, b3_ref, o_ref):
    # fc1 + relu (bf16 operands, f32 accumulate on the MXU)
    h1 = jnp.dot(x_ref[...], w1_ref[...], preferred_element_type=jnp.float32)
    h1 = jnp.maximum(h1 + b1_ref[...], 0.0)
    # fc2 + relu
    h2 = jnp.dot(h1.astype(jnp.bfloat16), w2_ref[...],
                 preferred_element_type=jnp.float32)
    h2 = jnp.maximum(h2 + b2_ref[...], 0.0)
    # fc3 (no activation) — narrow output: only the real output_dim columns are computed/stored
    out = jnp.dot(h2.astype(jnp.bfloat16), w3_ref[...],
                  preferred_element_type=jnp.float32)
    o_ref[...] = (out + b3_ref[...]).astype(o_ref.dtype)


def prepare_params(w1, b1, w2, b2, w3, b3):
    """One-time cast/reshape to the kernel's resident layout (hoisted off the hot path).
    Weights are (in_features, out_features) = transpose of nn.Linear storage."""
    return (w1.astype(jnp.bfloat16), b1.reshape(1, -1).astype(jnp.float32),
            w2.astype(jnp.bfloat16), b2.reshape(1, -1).astype(jnp.float32),
            w3.astype(jnp.bfloat16), b3.reshape(1, -1).astype(jnp.float32))


@jax.jit
def mlp_agent_forward(x, params):
    """Fused MLPAgent.forward. x: (B, input_dim) float32 -> (B, output_dim) float32."""
    w1, b1, w2, b2, w3, b3 = params
    B, input_dim = x.shape
    hidden = w1.shape[1]
    output_dim = w3.shape[1]

    tile_b, b_pad = _batch_tiling(B)

    x_p = x.astype(jnp.bfloat16)
    if b_pad != B:                       # cheap fused pad of the batch rows only
        x_p = jnp.pad(x_p, ((0, b_pad - B), (0, 0)))

    grid = (b_pad // tile_b,)

    # Batch-tiled x / out; constant block index for weights & biases so they stay
    # VMEM-resident across grid steps (Pallas skips the re-DMA).
    x_spec = pl.BlockSpec((tile_b, input_dim), lambda i: (i, 0))
    o_spec = pl.BlockSpec((tile_b, output_dim), lambda i: (i, 0))
    const = lambda a: pl.BlockSpec(a.shape, lambda i: (0, 0))

    flops = 2 * b_pad * (input_dim * hidden + hidden * hidden + hidden * output_dim)
    bytes_accessed = (x_p.size * 2
                      + (w1.size + w2.size + w3.size) * 2
                      + (b1.size + b2.size + b3.size) * 4
                      + b_pad * output_dim * 4)

    out = pl.pallas_call(
        mlp_kernel,
        out_shape=jax.ShapeDtypeStruct((b_pad, output_dim), jnp.float32),
        grid=grid,
        in_specs=[x_spec,
                  const(w1), const(b1),
                  const(w2), const(b2),
                  const(w3), const(b3)],
        out_specs=o_spec,
        compiler_params=pltpu.CompilerParams(
            dimension_semantics=("parallel",)),
        cost_estimate=pl.CostEstimate(flops=flops, transcendentals=0,
                                      bytes_accessed=bytes_accessed),
    )(x_p, w1, b1, w2, b2, w3, b3)

    return out[:B]


def init_params(key, input_dim, output_dim, hidden=128):
    """Deterministic parameter init mirroring nn.Linear shapes (stored transposed)."""
    keys = jax.random.split(key, 6)

    def lin(kw, kb, fan_in, fan_out):
        bound = 1.0 / jnp.sqrt(fan_in)
        w = jax.random.uniform(kw, (fan_in, fan_out), jnp.float32, -bound, bound)
        b = jax.random.uniform(kb, (1, fan_out), jnp.float32, -bound, bound)
        return w, b

    w1, b1 = lin(keys[0], keys[1], input_dim, hidden)
    w2, b2 = lin(keys[2], keys[3], hidden, hidden)
    w3, b3 = lin(keys[4], keys[5], hidden, output_dim)
    return w1, b1, w2, b2, w3, b3


def _reference(x, raw_params, bf16=True):
    w1, b1, w2, b2, w3, b3 = raw_params
    if bf16:
        cast = lambda a: a.astype(jnp.bfloat16)
        h = jnp.maximum(jnp.dot(cast(x), cast(w1), preferred_element_type=jnp.float32) + b1, 0.0)
        h = jnp.maximum(jnp.dot(cast(h), cast(w2), preferred_element_type=jnp.float32) + b2, 0.0)
        return jnp.dot(cast(h), cast(w3), preferred_element_type=jnp.float32) + b3
    h = jnp.maximum(x @ w1 + b1, 0.0)
    h = jnp.maximum(h @ w2 + b2, 0.0)
    return h @ w3 + b3


def _rel_err(a, b):
    return float(jnp.max(jnp.abs(a - b)) / (jnp.max(jnp.abs(b)) + 1e-6))


if __name__ == "__main__":
    # Small shapes consistent with the module: predict() implies output_dim=4
    # (move_x, move_y, angle, shoot); modest input_dim and batch.
    batch, input_dim, output_dim = 8, 32, 4

    key = jax.random.PRNGKey(0)
    kx, kx2, kp = jax.random.split(key, 3)
    raw_params = init_params(kp, input_dim, output_dim)
    params = prepare_params(*raw_params)          # hoisted one-time cast

    x = jax.random.normal(kx, (batch, input_dim), jnp.float32)
    out = jax.block_until_ready(mlp_agent_forward(x, params))
    assert out.shape == (batch, output_dim)

    # Relative-error checks (bf16-matched reference, then pure-f32 sanity check).
    assert _rel_err(out, _reference(x, raw_params, bf16=True)) < 1e-2
    assert _rel_err(out, _reference(x, raw_params, bf16=False)) < 5e-2

    # Exercise the multi-step batch grid + row-padding path as well.
    batch2 = 400
    x2 = jax.random.normal(kx2, (batch2, input_dim), jnp.float32)
    out2 = jax.block_until_ready(mlp_agent_forward(x2, params))
    assert out2.shape == (batch2, output_dim)
    assert _rel_err(out2, _reference(x2, raw_params, bf16=True)) < 1e-2
    assert _rel_err(out2, _reference(x2, raw_params, bf16=False)) < 5e-2

    # TODO(synk): predict()/reward()/optimizer/save_model are host-side control flow and
    # training logic, not part of the fused forward kernel.
    print("KERNEL_OK")
</pallas_src>

<mosaic_0001>
module attributes {stable_mosaic.version = 11 : i64} {
  func.func @mlp_kernel(%arg0: i32, %arg1: memref<16x32xbf16, #tpu.memory_space<vmem>>, %arg2: memref<32x128xbf16, #tpu.memory_space<vmem>>, %arg3: memref<1x128xf32, #tpu.memory_space<vmem>>, %arg4: memref<128x128xbf16, #tpu.memory_space<vmem>>, %arg5: memref<1x128xf32, #tpu.memory_space<vmem>>, %arg6: memref<128x4xbf16, #tpu.memory_space<vmem>>, %arg7: memref<1x4xf32, #tpu.memory_space<vmem>>, %arg8: memref<16x4xf32, #tpu.memory_space<vmem>>) attributes {dimension_semantics = [#tpu.dimension_semantics<parallel>], iteration_bounds = array<i64: 1>, scalar_prefetch = 0 : i64, scratch_operands = 0 : i64, tpu.core_type = #tpu.core_type<tc>, window_params = [{transform_indices = @transform_0, window_bounds = array<i64: 16, 32>}, {pipeline_mode = #tpu.pipeline_mode<synchronous>, transform_indices = @transform_1, window_bounds = array<i64: 32, 128>}, {pipeline_mode = #tpu.pipeline_mode<synchronous>, transform_indices = @transform_2, window_bounds = array<i64: 1, 128>}, {pipeline_mode = #tpu.pipeline_mode<synchronous>, transform_indices = @transform_3, window_bounds = array<i64: 128, 128>}, {pipeline_mode = #tpu.pipeline_mode<synchronous>, transform_indices = @transform_4, window_bounds = array<i64: 1, 128>}, {pipeline_mode = #tpu.pipeline_mode<synchronous>, transform_indices = @transform_5, window_bounds = array<i64: 128, 4>}, {pipeline_mode = #tpu.pipeline_mode<synchronous>, transform_indices = @transform_6, window_bounds = array<i64: 1, 4>}, {transform_indices = @transform_7, window_bounds = array<i64: 16, 4>}]} {
    %c0 = arith.constant 0 : index
    %c0_0 = arith.constant 0 : index
    %0 = vector.load %arg1[%c0, %c0_0] : memref<16x32xbf16, #tpu.memory_space<vmem>>, vector<16x32xbf16>
    %c0_1 = arith.constant 0 : index
    %c0_2 = arith.constant 0 : index
    %1 = vector.load %arg2[%c0_1, %c0_2] : memref<32x128xbf16, #tpu.memory_space<vmem>>, vector<32x128xbf16>
    %cst = arith.constant dense<0.000000e+00> : vector<16x128xf32>
    %2 = tpu.matmul %0, %1, %cst {dimension_numbers = #tpu.dot_dimension_numbers<[1], [0], [0], [1], [0, 0, 1, 1], [], []>} : vector<16x32xbf16>, vector<32x128xbf16>, vector<16x128xf32> -> vector<16x128xf32>
    %c0_3 = arith.constant 0 : index
    %c0_4 = arith.constant 0 : index
    %3 = vector.load %arg3[%c0_3, %c0_4] : memref<1x128xf32, #tpu.memory_space<vmem>>, vector<1x128xf32>
    %4 = vector.broadcast %3 : vector<1x128xf32> to vector<16x128xf32>
    %5 = arith.addf %2, %4 : vector<16x128xf32>
    %cst_5 = arith.constant 0.000000e+00 : f32
    %6 = vector.broadcast %cst_5 : f32 to vector<16x128xf32>
    %7 = arith.maximumf %5, %6 : vector<16x128xf32>
    %8 = arith.truncf %7 : vector<16x128xf32> to vector<16x128xbf16>
    %c0_6 = arith.constant 0 : index
    %c0_7 = arith.constant 0 : index
    %9 = vector.load %arg4[%c0_6, %c0_7] : memref<128x128xbf16, #tpu.memory_space<vmem>>, vector<128x128xbf16>
    %cst_8 = arith.constant dense<0.000000e+00> : vector<16x128xf32>
    %10 = tpu.matmul %8, %9, %cst_8 {dimension_numbers = #tpu.dot_dimension_numbers<[1], [0], [0], [1], [0, 0, 1, 1], [], []>} : vector<16x128xbf16>, vector<128x128xbf16>, vector<16x128xf32> -> vector<16x128xf32>
    %c0_9 = arith.constant 0 : index
    %c0_10 = arith.constant 0 : index
    %11 = vector.load %arg5[%c0_9, %c0_10] : memref<1x128xf32, #tpu.memory_space<vmem>>, vector<1x128xf32>
    %12 = vector.broadcast %11 : vector<1x128xf32> to vector<16x128xf32>
    %13 = arith.addf %10, %12 : vector<16x128xf32>
    %cst_11 = arith.constant 0.000000e+00 : f32
    %14 = vector.broadcast %cst_11 : f32 to vector<16x128xf32>
    %15 = arith.maximumf %13, %14 : vector<16x128xf32>
    %16 = arith.truncf %15 : vector<16x128xf32> to vector<16x128xbf16>
    %c0_12 = arith.constant 0 : index
    %c0_13 = arith.constant 0 : index
    %17 = vector.load %arg6[%c0_12, %c0_13] : memref<128x4xbf16, #tpu.memory_space<vmem>>, vector<128x4xbf16>
    %cst_14 = arith.constant dense<0.000000e+00> : vector<16x4xf32>
    %18 = tpu.matmul %16, %17, %cst_14 {dimension_numbers = #tpu.dot_dimension_numbers<[1], [0], [0], [1], [0, 0, 1, 1], [], []>} : vector<16x128xbf16>, vector<128x4xbf16>, vector<16x4xf32> -> vector<16x4xf32>
    %c0_15 = arith.constant 0 : index
    %c0_16 = arith.constant 0 : index
    %19 = vector.load %arg7[%c0_15, %c0_16] : memref<1x4xf32, #tpu.memory_space<vmem>>, vector<1x4xf32>
    %20 = vector.broadcast %19 : vector<1x4xf32> to vector<16x4xf32>
    %21 = arith.addf %18, %20 : vector<16x4xf32>
    %c0_17 = arith.constant 0 : index
    %c0_18 = arith.constant 0 : index
    %22 = vector.load %arg8[%c0_17, %c0_18] : memref<16x4xf32, #tpu.memory_space<vmem>>, vector<16x4xf32>
    tpu.vector_store %arg8[%c0_17, %c0_18], %21 {strides = array<i32>} : memref<16x4xf32, #tpu.memory_space<vmem>>, vector<16x4xf32>,
    return
  }
  func.func @transform_0(%arg0: i32) -> (i32, i32) {
    %c0_i32 = arith.constant 0 : i32
    %c0_i32_0 = arith.constant 0 : i32
    return %arg0, %c0_i32 : i32, i32
  }
  func.func @transform_1(%arg0: i32) -> (i32, i32) {
    %c0_i32 = arith.constant 0 : i32
    %c0_i32_0 = arith.constant 0 : i32
    %c0_i32_1 = arith.constant 0 : i32
    return %c0_i32, %c0_i32_0 : i32, i32
  }
  func.func @transform_2(%arg0: i32) -> (i32, i32) {
    %c0_i32 = arith.constant 0 : i32
    %c0_i32_0 = arith.constant 0 : i32
    %c0_i32_1 = arith.constant 0 : i32
    return %c0_i32, %c0_i32_0 : i32, i32
  }
  func.func @transform_3(%arg0: i32) -> (i32, i32) {
    %c0_i32 = arith.constant 0 : i32
    %c0_i32_0 = arith.constant 0 : i32
    %c0_i32_1 = arith.constant 0 : i32
    return %c0_i32, %c0_i32_0 : i32, i32
  }
  func.func @transform_4(%arg0: i32) -> (i32, i32) {
    %c0_i32 = arith.constant 0 : i32
    %c0_i32_0 = arith.constant 0 : i32
    %c0_i32_1 = arith.constant 0 : i32
    return %c0_i32, %c0_i32_0 : i32, i32
  }
  func.func @transform_5(%arg0: i32) -> (i32, i32) {
    %c0_i32 = arith.constant 0 : i32
    %c0_i32_0 = arith.constant 0 : i32
    %c0_i32_1 = arith.constant 0 : i32
    return %c0_i32, %c0_i32_0 : i32, i32
  }
  func.func @transform_6(%arg0: i32) -> (i32, i32) {
    %c0_i32 = arith.constant 0 : i32
    %c0_i32_0 = arith.constant 0 : i32
    %c0_i32_1 = arith.constant 0 : i32
    return %c0_i32, %c0_i32_0 : i32, i32
  }
  func.func @transform_7(%arg0: i32) -> (i32, i32) {
    %c0_i32 = arith.constant 0 : i32
    %c0_i32_0 = arith.constant 0 : i32
    return %arg0, %c0_i32 : i32, i32
  }
}

</mosaic_0001>

<llo_original>
// kernel: mlp_agent_forward.1
$region0: #{mlp_agent_forward.1}
  #allocation0 [shape = 'u32[]', space=smem, size = 0x4, offset = 0x4, fixed_abs, tag = 'smem constant byte address 0x4 - core index']
  #allocation1 [shape = 'u32[72,128]{1,0:T(1,128)}', space=vmem, size = 0x9000, scoped, tag = 'internal scratch']
  %s0 = inlined_call_operand.vmem [shape: bf16[16,32], index: 0, kind: input, shape index: {}]
  %s1 = inlined_call_operand.vmem [shape: bf16[32,128], index: 1, kind: input, shape index: {}]
  %s2 = inlined_call_operand.vmem [shape: f32[1,128], index: 2, kind: input, shape index: {}]
  %s3 = inlined_call_operand.vmem [shape: bf16[128,128], index: 3, kind: input, shape index: {}]
  %s4 = inlined_call_operand.vmem [shape: f32[1,128], index: 4, kind: input, shape index: {}]
  %s5 = inlined_call_operand.vmem [shape: bf16[128,4], index: 5, kind: input, shape index: {}]
  %s6 = inlined_call_operand.vmem [shape: f32[1,4], index: 6, kind: input, shape index: {}]
  %s7 = inlined_call_operand.vmem [shape: f32[16,4], index: 7, kind: output, shape index: {}]
  %s8 = sld [smem:[#allocation0]]
  $region38: #{mlp_agent_forward.1} parent=0
    _
  %s10 = ssub.s32 1, %s8
  %s11 = scalar_select 0, %s10, %s8
  // Predicated region
  $region2: #{mlp_agent_forward.1} parent=0 // pred_check
    _
  $region3: #{mlp_agent_forward.1} parent=0 // pred_check_branch
    %13 = sbr.rel (0) target = $region5
  $region4: #{mlp_agent_forward.1} parent=0 // pred_region
    _
  $region5: #{mlp_agent_forward.1} parent=0 // pred_fallthru
    _
  // Predicated region
  $region6: #{mlp_agent_forward.1} parent=0 // pred_check
    _
  $region7: #{mlp_agent_forward.1} parent=0 // pred_check_branch
    %15 = sbr.rel (0) target = $region9
  $region8: #{mlp_agent_forward.1} parent=0 // pred_region
    _
  $region9: #{mlp_agent_forward.1} parent=0 // pred_fallthru
    _
  // Predicated region
  $region10: #{mlp_agent_forward.1} parent=0 // pred_check
    _
  $region11: #{mlp_agent_forward.1} parent=0 // pred_check_branch
    %17 = sbr.rel (0) target = $region13
  $region12: #{mlp_agent_forward.1} parent=0 // pred_region
    _
  $region13: #{mlp_agent_forward.1} parent=0 // pred_fallthru
    _
  // Predicated region
  $region14: #{mlp_agent_forward.1} parent=0 // pred_check
    _
  $region15: #{mlp_agent_forward.1} parent=0 // pred_check_branch
    %19 = sbr.rel (0) target = $region17
  $region16: #{mlp_agent_forward.1} parent=0 // pred_region
    _
  $region17: #{mlp_agent_forward.1} parent=0 // pred_fallthru
    _
  // Predicated region
  $region18: #{mlp_agent_forward.1} parent=0 // pred_check
    _
  $region19: #{mlp_agent_forward.1} parent=0 // pred_check_branch
    %21 = sbr.rel (0) target = $region21
  $region20: #{mlp_agent_forward.1} parent=0 // pred_region
    _
  $region21: #{mlp_agent_forward.1} parent=0 // pred_fallthru
    _
  // Predicated region
  $region22: #{mlp_agent_forward.1} parent=0 // pred_check
    _
  $region23: #{mlp_agent_forward.1} parent=0 // pred_check_branch
    %23 = sbr.rel (0) target = $region25
  $region24: #{mlp_agent_forward.1} parent=0 // pred_region
    _
  $region25: #{mlp_agent_forward.1} parent=0 // pred_fallthru
    _
  // Predicated region
  $region26: #{mlp_agent_forward.1} parent=0 // pred_check
    _
  $region27: #{mlp_agent_forward.1} parent=0 // pred_check_branch
    %25 = sbr.rel (0) target = $region29
  $region28: #{mlp_agent_forward.1} parent=0 // pred_region
    _
  $region29: #{mlp_agent_forward.1} parent=0 // pred_fallthru
    _
  %v27 = vld [vmem:[%s0] sm:$0xf]
  %v28 = vld [vmem:[%s0 + $0x4] sm:$0xf]
  %v29 = vld [vmem:[%s1] sm:$0xf]
  %v30 = vld [vmem:[%s1 + $0x4] sm:$0xf]
  %v31 = vld [vmem:[%s1 + $0x8] sm:$0xf]
  %v32 = vld [vmem:[%s1 + $0xc] sm:$0xf]
  %v33 = vld [vmem:[%s2] sm:$0x1]
  %v35 = vperm.slane %v33, 0
  %v39 = vunpack.c.l.b16 %v27
  %v40 = vunpack.c.l.b16 %v28
  %v41 = vpack.c.b16 %v40, %v39
  %v46 = vunpack.c.l.b16 %v29
  %v47 = vunpack.c.l.b16 %v30
  %v48 = vunpack.c.l.b16 %v31
  %v49 = vunpack.c.l.b16 %v32
  %v50 = vpack.c.b16 %v47, %v46
  %v51 = vpack.c.b16 %v49, %v48
  %vm54 = vcmask 261120
  %v56 = vsel %vm54, %v41, 0
  %58 = vmatpush.bf16.msra.mxu0 0
  %59 = vmatpush.bf16.msra.mxu0 0
  %60 = vmatpush.bf16.msra.mxu0 0
  %61 = vmatpush.bf16.msra.mxu0 0
  %62 = vmatpush.bf16.msra.mxu0 0
  %63 = vmatpush.bf16.msra.mxu0 0
  %64 = vmatpush.bf16.msra.mxu0 %v51
  %65 = vmatpush.bf16.msra.mxu0 %v50
  %66 = vmatmul.bf16.gmra.mxu0 %v56
  %v67 = vpop.f32.mrf.mxu0
  %v68 = vadd.f32 %v35, %v67
  %v69 = vpop.f32.mrf.mxu0
  %v70 = vadd.f32 %v35, %v69
  %71 = vdwg.mxu0
  %v72 = vmax.f32 %v68, 0.0
  %v73 = vmax.f32 %v70, 0.0
  %v74 = vpack.c.bf16 %v73, %v72
  %v75 = vld [vmem:[%s3] sm:$0xf]
  %v76 = vld [vmem:[%s3 + $0x4] sm:$0xf]
  %v77 = vld [vmem:[%s3 + $0x8] sm:$0xf]
  %v78 = vld [vmem:[%s3 + $0xc] sm:$0xf]
  %v79 = vld [vmem:[%s3 + $0x10] sm:$0xf]
  %v80 = vld [vmem:[%s3 + $0x14] sm:$0xf]
  %v81 = vld [vmem:[%s3 + $0x18] sm:$0xf]
  %v82 = vld [vmem:[%s3 + $0x1c] sm:$0xf]
  %v83 = vld [vmem:[%s3 + $0x20] sm:$0xf]
  %v84 = vld [vmem:[%s3 + $0x24] sm:$0xf]
  %v85 = vld [vmem:[%s3 + $0x28] sm:$0xf]
  %v86 = vld [vmem:[%s3 + $0x2c] sm:$0xf]
  %v87 = vld [vmem:[%s3 + $0x30] sm:$0xf]
  %v88 = vld [vmem:[%s3 + $0x34] sm:$0xf]
  %v89 = vld [vmem:[%s3 + $0x38] sm:$0xf]
  %v90 = vld [vmem:[%s3 + $0x3c] sm:$0xf]
  %v91 = vld [vmem:[%s4] sm:$0x1]
  %v93 = vperm.slane %v91, 0
  %v111 = vunpack.c.l.b16 %v75
  %v112 = vunpack.c.l.b16 %v76
  %v113 = vunpack.c.l.b16 %v77
  %v114 = vunpack.c.l.b16 %v78
  %v115 = vunpack.c.l.b16 %v79
  %v116 = vunpack.c.l.b16 %v80
  %v117 = vunpack.c.l.b16 %v81
  %v118 = vunpack.c.l.b16 %v82
  %v119 = vunpack.c.l.b16 %v83
  %v120 = vunpack.c.l.b16 %v84
  %v121 = vunpack.c.l.b16 %v85
  %v122 = vunpack.c.l.b16 %v86
  %v123 = vunpack.c.l.b16 %v87
  %v124 = vunpack.c.l.b16 %v88
  %v125 = vunpack.c.l.b16 %v89
  %v126 = vunpack.c.l.b16 %v90
  %v127 = vpack.c.b16 %v112, %v111
  %v128 = vpack.c.b16 %v114, %v113
  %v129 = vpack.c.b16 %v116, %v115
  %v130 = vpack.c.b16 %v118, %v117
  %v131 = vpack.c.b16 %v120, %v119
  %v132 = vpack.c.b16 %v122, %v121
  %v133 = vpack.c.b16 %v124, %v123
  %v134 = vpack.c.b16 %v126, %v125
  %143 = vmatpush.bf16.msra.mxu0 %v134
  %144 = vmatpush.bf16.msra.mxu0 %v133
  %145 = vmatpush.bf16.msra.mxu0 %v132
  %146 = vmatpush.bf16.msra.mxu0 %v131
  %147 = vmatpush.bf16.msra.mxu0 %v130
  %148 = vmatpush.bf16.msra.mxu0 %v129
  %149 = vmatpush.bf16.msra.mxu0 %v128
  %150 = vmatpush.bf16.msra.mxu0 %v127
  %151 = vmatmul.bf16.gmra.mxu0 %v74
  %v152 = vpop.f32.mrf.mxu0
  %v153 = vadd.f32 %v93, %v152
  %v154 = vpop.f32.mrf.mxu0
  %v155 = vadd.f32 %v93, %v154
  %156 = vdwg.mxu0
  %v157 = vmax.f32 %v153, 0.0
  %v158 = vmax.f32 %v155, 0.0
  %v159 = vpack.c.bf16 %v158, %v157
  %v160 = vld [vmem:[%s5] sm:$0xf]
  %v161 = vld [vmem:[%s5 + $0x4] sm:$0xf]
  %v162 = vld [vmem:[%s5 + $0x8] sm:$0xf]
  %v163 = vld [vmem:[%s5 + $0xc] sm:$0xf]
  %v164 = vld [vmem:[%s5 + $0x10] sm:$0xf]
  %v165 = vld [vmem:[%s5 + $0x14] sm:$0xf]
  %v166 = vld [vmem:[%s5 + $0x18] sm:$0xf]
  %v167 = vld [vmem:[%s5 + $0x1c] sm:$0xf]
  %v168 = vld [vmem:[%s5 + $0x20] sm:$0xf]
  %v169 = vld [vmem:[%s5 + $0x24] sm:$0xf]
  %v170 = vld [vmem:[%s5 + $0x28] sm:$0xf]
  %v171 = vld [vmem:[%s5 + $0x2c] sm:$0xf]
  %v172 = vld [vmem:[%s5 + $0x30] sm:$0xf]
  %v173 = vld [vmem:[%s5 + $0x34] sm:$0xf]
  %v174 = vld [vmem:[%s5 + $0x38] sm:$0xf]
  %v175 = vld [vmem:[%s5 + $0x3c] sm:$0xf]
  %v176 = vld [vmem:[%s6] sm:$0x1]
  %v178 = vperm.slane %v176, 0
  %v196 = vunpack.c.l.b16 %v160
  %v197 = vunpack.c.l.b16 %v161
  %v198 = vunpack.c.l.b16 %v162
  %v199 = vunpack.c.l.b16 %v163
  %v200 = vunpack.c.l.b16 %v164
  %v201 = vunpack.c.l.b16 %v165
  %v202 = vunpack.c.l.b16 %v166
  %v203 = vunpack.c.l.b16 %v167
  %v204 = vunpack.c.l.b16 %v168
  %v205 = vunpack.c.l.b16 %v169
  %v206 = vunpack.c.l.b16 %v170
  %v207 = vunpack.c.l.b16 %v171
  %v208 = vunpack.c.l.b16 %v172
  %v209 = vunpack.c.l.b16 %v173
  %v210 = vunpack.c.l.b16 %v174
  %v211 = vunpack.c.l.b16 %v175
  %v212 = vpack.c.b16 %v197, %v196
  %v213 = vpack.c.b16 %v199, %v198
  %v214 = vpack.c.b16 %v201, %v200
  %v215 = vpack.c.b16 %v203, %v202
  %v216 = vpack.c.b16 %v205, %v204
  %v217 = vpack.c.b16 %v207, %v206
  %v218 = vpack.c.b16 %v209, %v208
  %v219 = vpack.c.b16 %v211, %v210
  %228 = vmatpush.bf16.msra.mxu0 %v219
  %229 = vmatpush.bf16.msra.mxu0 %v218
  %230 = vmatpush.bf16.msra.mxu0 %v217
  %231 = vmatpush.bf16.msra.mxu0 %v216
  %232 = vmatpush.bf16.msra.mxu0 %v215
  %233 = vmatpush.bf16.msra.mxu0 %v214
  %234 = vmatpush.bf16.msra.mxu0 %v213
  %235 = vmatpush.bf16.msra.mxu0 %v212
  %236 = vmatmul.bf16.gmra.mxu0 %v159
  %v237 = vpop.f32.mrf.mxu0
  %v238 = vadd.f32 %v178, %v237
  %v239 = vpop.f32.mrf.mxu0
  %v240 = vadd.f32 %v178, %v239
  %241 = vdwg.mxu0
  %vm242 = vcmask 31744
  %243 = vst.msk [vmem:[%s7] sm:$0xff] %vm242, %v238
  %244 = vst.msk [vmem:[%s7 + $0x8] sm:$0xff] %vm242, %v240
  // Predicated region
  $region30: #{mlp_agent_forward.1} parent=0 // pred_check
    _
  $region31: #{mlp_agent_forward.1} parent=0 // pred_check_branch
    %246 = sbr.rel (0) target = $region33
  $region32: #{mlp_agent_forward.1} parent=0 // pred_region
    _
  $region33: #{mlp_agent_forward.1} parent=0 // pred_fallthru
    _
  // Predicated region
  $region34: #{mlp_agent_forward.1} parent=0 // pred_check
    _
  $region35: #{mlp_agent_forward.1} parent=0 // pred_check_branch
    %248 = sbr.rel (0) target = $region37
  $region36: #{mlp_agent_forward.1} parent=0 // pred_region
    _
  $region37: #{mlp_agent_forward.1} parent=0 // pred_fallthru
    _

</llo_original>
